<compile_context>
chip_gen: v7x
topology: tpu7x:2x2x1
jax: 0.10.0
libtpu: 0.0.40
codegen_flags: <defaults>
</compile_context>

<pallas_src>
import math

import jax
import jax.numpy as jnp
from jax.experimental import pallas as pl
from jax.experimental.pallas import tpu as pltpu


def _round_up(x, m):
    return ((x + m - 1) // m) * m


def _cdiv(a, b):
    return (a + b - 1) // b


# ---------------------------------------------------------------------------
# Kernel
# ---------------------------------------------------------------------------
def _ffn_kernel(x_ref, w1_ref, w3_ref, w2_ref, o_ref, acc_ref):
    j = pl.program_id(1)

    @pl.when(j == 0)
    def _():
        acc_ref[...] = jnp.zeros_like(acc_ref)

    x = x_ref[...]
    # Up projections on the MXU with f32 accumulation.
    g = jnp.dot(x, w1_ref[...], preferred_element_type=jnp.float32)
    u = jnp.dot(x, w3_ref[...], preferred_element_type=jnp.float32)
    # SwiGLU gate in f32 (sigmoid uses the otherwise-idle EUP slot).
    h = (g * jax.nn.sigmoid(g)) * u
    # Down projection for this hidden tile, accumulated across the hidden axis.
    acc_ref[...] += jnp.dot(h.astype(x.dtype), w2_ref[...],
                            preferred_element_type=jnp.float32)

    @pl.when(j == pl.num_programs(1) - 1)
    def _():
        o_ref[...] = acc_ref[...].astype(o_ref.dtype)


# ---------------------------------------------------------------------------
# Hardware-aware knobs
# ---------------------------------------------------------------------------
def _vmem_budget_and_limit():
    """Generation-aware VMEM budget (tile picker) and compiler limit."""
    cap = 64 * 1024 * 1024  # conservative default: v7x per-TensorCore VMEM
    try:
        cap = int(pltpu.get_tpu_info().vmem_capacity_bytes)
    except Exception:
        pass
    limit = cap * 7 // 8                       # headroom for Mosaic internals
    budget = max(8 << 20, limit - (16 << 20))  # extra margin for scratch/out
    # v6e/v5e (128 MiB): budget ~96 MiB, limit ~112 MiB.
    # v7x (64 MiB per TC): budget ~40 MiB, limit ~56 MiB.
    return budget, limit


def _num_tensorcores():
    try:
        kind = jax.devices()[0].device_kind.lower()
    except Exception:
        return 1
    # v4 / v5p megacore and v7x have 2 TensorCores per chip.
    for tag in ("v7", "v4", "v5p"):
        if tag in kind:
            return 2
    return 1


def _pick_tiles(rows, dim, hidden, itemsize, budget_bytes, num_cores):
    """Pick (row_tile tm, hidden_tile th).

    Priorities:
      1. Keep tm large (it sets MXU M occupancy and amortizes weight
         streaming); shrink th before tm, and only fall to the sublane pack
         as an absolute last resort.
      2. Prefer th == hidden (weights fully VMEM-resident: DMA'd once, not
         once per row tile).
      3. Otherwise keep th >= 256 (prefer 512) so the f32 accumulator RMW
         stays hidden under the matmuls.
      4. On multi-TensorCore parts, cap tm so the row grid has >= 2 entries.
    Returns None if even the minimal tiling does not fit the budget.
    """
    pack = {4: 8, 2: 16, 1: 32}.get(itemsize, 8)
    b = itemsize

    def usage(tm, th):
        return (2 * tm * dim * b          # x tile (double buffered)
                + 2 * 2 * dim * th * b    # w1 + w3 tiles
                + 2 * th * dim * b        # w2 tile
                + 2 * tm * dim * b        # out tile
                + tm * dim * 4)           # f32 accumulator scratch

    # --- row-tile candidates, largest / most preferred first ---------------
    if rows <= 512:
        tm_cands = [rows]                          # full-rows block is legal
        if num_cores > 1 and rows >= 2 * pack:     # give both TCs work
            tm_cands.append(_round_up(_cdiv(rows, 2), pack))
        tm_cands += [t for t in (256, 128) if t < rows]
        tm_cands.append(pack)
    else:
        tm_cands = [512, 384, 256, 128]
        if num_cores > 1:
            cap = _round_up(_cdiv(rows, num_cores), pack)
            tm_cands = [min(t, cap) for t in tm_cands]
        tm_cands.append(pack)
    seen, clean = set(), []
    for t in tm_cands:
        t = max(pack, min(t, _round_up(rows, pack)))
        if t not in seen:
            seen.add(t)
            clean.append(t)
    tm_cands = clean

    # --- hidden-tile candidates, preference order ---------------------------
    th_cands = [hidden] + [t for t in (512, 384, 256, 128) if t < hidden]

    for tm in tm_cands:
        fitting = [th for th in th_cands if usage(tm, th) <= budget_bytes]
        if not fitting:
            continue
        # Prefer tiles that divide hidden exactly (no per-call weight padding).
        divisors = [th for th in fitting if hidden % th == 0]
        return tm, (divisors[0] if divisors else fitting[0])
    return None


# ---------------------------------------------------------------------------
# Wrapper
# ---------------------------------------------------------------------------
def _feedforward_xla(x, w1, w3, w2):
    g = jnp.dot(x, w1, preferred_element_type=jnp.float32)
    u = jnp.dot(x, w3, preferred_element_type=jnp.float32)
    h = (g * jax.nn.sigmoid(g)) * u
    return jnp.dot(h.astype(x.dtype), w2, preferred_element_type=jnp.float32)


def feedforward(x, w1, w3, w2, *, compute_dtype=None,
                vmem_budget_bytes=None, vmem_limit_bytes=None):
    """x: (..., dim); w1, w3: (dim, hidden); w2: (hidden, dim).

    compute_dtype: optionally cast matmul operands (e.g. jnp.bfloat16) while
    keeping f32 accumulation and the f32 SiLU gate; output keeps x.dtype.
    """
    orig_shape = x.shape
    orig_dtype = x.dtype
    dim = orig_shape[-1]
    rows = math.prod(orig_shape[:-1]) if len(orig_shape) > 1 else 1
    hidden = w1.shape[1]
    assert w1.shape == (dim, hidden)
    assert w3.shape == (dim, hidden)
    assert w2.shape == (hidden, dim)

    if compute_dtype is not None:
        x = x.astype(compute_dtype)
        w1 = w1.astype(compute_dtype)
        w3 = w3.astype(compute_dtype)
        w2 = w2.astype(compute_dtype)

    budget, limit = _vmem_budget_and_limit()
    if vmem_budget_bytes is not None:
        budget = vmem_budget_bytes
    if vmem_limit_bytes is None:
        vmem_limit_bytes = max(limit, budget + (8 << 20))

    tiles = _pick_tiles(rows, dim, hidden, x.dtype.itemsize, budget,
                        _num_tensorcores())
    if tiles is None:
        # TODO(synk): tile the model dim for very-large-dim f32 models instead
        # of falling back to plain XLA when the full-dim working set can't fit.
        out = _feedforward_xla(x, w1, w3, w2).astype(orig_dtype)
        return out.reshape(orig_shape)
    tm, th = tiles

    x2d = x.reshape(rows, dim)

    # Hidden is a reduction axis, so its tiles must divide evenly.  Padding is
    # exact (silu(0)*0 = 0 and zero w2 rows add nothing).  The tile picker
    # prefers th values that divide hidden (and full-hidden residency needs no
    # pad), so this path is normally skipped; for production use, pad the
    # weights once at load time instead of per call.
    hidden_p = _round_up(hidden, th)
    if hidden_p != hidden:
        w1 = jnp.pad(w1, ((0, 0), (0, hidden_p - hidden)))
        w3 = jnp.pad(w3, ((0, 0), (0, hidden_p - hidden)))
        w2 = jnp.pad(w2, ((0, hidden_p - hidden), (0, 0)))

    grid = (_cdiv(rows, tm), hidden_p // th)

    out2d = pl.pallas_call(
        _ffn_kernel,
        out_shape=jax.ShapeDtypeStruct((rows, dim), orig_dtype),
        grid_spec=pltpu.PrefetchScalarGridSpec(
            num_scalar_prefetch=0,
            grid=grid,
            in_specs=[
                pl.BlockSpec((tm, dim), lambda i, j: (i, 0)),   # x rows
                pl.BlockSpec((dim, th), lambda i, j: (0, j)),   # w1
                pl.BlockSpec((dim, th), lambda i, j: (0, j)),   # w3
                pl.BlockSpec((th, dim), lambda i, j: (j, 0)),   # w2
            ],
            out_specs=pl.BlockSpec((tm, dim), lambda i, j: (i, 0)),
            scratch_shapes=[pltpu.VMEM((tm, dim), jnp.float32)],
        ),
        compiler_params=pltpu.CompilerParams(
            dimension_semantics=("parallel", "arbitrary"),
            vmem_limit_bytes=int(vmem_limit_bytes),
        ),
    )(x2d, w1, w3, w2)

    return out2d.reshape(orig_shape)


# ---------------------------------------------------------------------------
# Self-test
# ---------------------------------------------------------------------------
def _llama_hidden_dim(dim, hidden_dim, multiple_of, ffn_dim_multiplier):
    # Mirrors the PyTorch FeedForward.__init__ hidden_dim computation.
    hidden_dim = int(2 * hidden_dim / 3)
    if ffn_dim_multiplier is not None:
        hidden_dim = int(ffn_dim_multiplier * hidden_dim)
    return multiple_of * ((hidden_dim + multiple_of - 1) // multiple_of)


if __name__ == "__main__":
    key = jax.random.PRNGKey(0)

    # Primary small shape consistent with the module: batch=2, seq=8, dim=32.
    batch, seq, dim = 2, 8, 32
    hidden = _llama_hidden_dim(dim, hidden_dim=128, multiple_of=32,
                               ffn_dim_multiplier=None)  # -> 96
    kx, k1, k2, k3, key = jax.random.split(key, 5)
    x = jax.random.normal(kx, (batch, seq, dim), dtype=jnp.float32)
    # (in, out) layout == torch Linear weight transposed.
    w1 = jax.random.normal(k1, (dim, hidden), dtype=jnp.float32) / math.sqrt(dim)
    w3 = jax.random.normal(k3, (dim, hidden), dtype=jnp.float32) / math.sqrt(dim)
    w2 = jax.random.normal(k2, (hidden, dim), dtype=jnp.float32) / math.sqrt(hidden)

    out = feedforward(x, w1, w3, w2)
    jax.block_until_ready(out)
    ref = _feedforward_xla(x, w1, w3, w2).astype(x.dtype)
    assert out.shape == x.shape and out.dtype == x.dtype
    assert jnp.allclose(out, ref, atol=2e-3, rtol=2e-3), float(
        jnp.max(jnp.abs(out - ref)))

    # Second shape exercising a non-multiple-of-8 row count (full-rows tile).
    b2, s2, d2 = 1, 19, 64
    h2 = _llama_hidden_dim(d2, hidden_dim=256, multiple_of=32,
                           ffn_dim_multiplier=None)  # -> 192
    kx, k1, k2, k3, key = jax.random.split(key, 5)
    x2 = jax.random.normal(kx, (b2, s2, d2), dtype=jnp.float32)
    w1b = jax.random.normal(k1, (d2, h2), dtype=jnp.float32) / math.sqrt(d2)
    w3b = jax.random.normal(k3, (d2, h2), dtype=jnp.float32) / math.sqrt(d2)
    w2b = jax.random.normal(k2, (h2, d2), dtype=jnp.float32) / math.sqrt(h2)
    out2 = feedforward(x2, w1b, w3b, w2b)
    jax.block_until_ready(out2)
    ref2 = _feedforward_xla(x2, w1b, w3b, w2b).astype(x2.dtype)
    assert jnp.allclose(out2, ref2, atol=2e-3, rtol=2e-3), float(
        jnp.max(jnp.abs(out2 - ref2)))

    print("KERNEL_OK")
</pallas_src>

<mosaic_0001>
module attributes {stable_mosaic.version = 11 : i64} {
  func.func @_ffn_kernel(%arg0: i32, %arg1: i32, %arg2: memref<16x32xf32, #tpu.memory_space<vmem>>, %arg3: memref<32x96xf32, #tpu.memory_space<vmem>>, %arg4: memref<32x96xf32, #tpu.memory_space<vmem>>, %arg5: memref<96x32xf32, #tpu.memory_space<vmem>>, %arg6: memref<16x32xf32, #tpu.memory_space<vmem>>, %arg7: memref<16x32xf32, #tpu.memory_space<vmem>>) attributes {dimension_semantics = [#tpu.dimension_semantics<parallel>, #tpu.dimension_semantics<arbitrary>], iteration_bounds = array<i64: 1, 1>, scalar_prefetch = 0 : i64, scratch_operands = 1 : i64, tpu.core_type = #tpu.core_type<tc>, window_params = [{transform_indices = @transform_0, window_bounds = array<i64: 16, 32>}, {transform_indices = @transform_1, window_bounds = array<i64: 32, 96>}, {transform_indices = @transform_2, window_bounds = array<i64: 32, 96>}, {transform_indices = @transform_3, window_bounds = array<i64: 96, 32>}, {transform_indices = @transform_4, window_bounds = array<i64: 16, 32>}]} {
    %c0_i32 = arith.constant 0 : i32
    %0 = arith.cmpi eq, %arg1, %c0_i32 : i32
    %1 = arith.extui %0 : i1 to i32
    %c0_i32_0 = arith.constant 0 : i32
    %2 = arith.cmpi ne, %1, %c0_i32_0 : i32
    scf.if %2 {
      %cst_17 = arith.constant 0.000000e+00 : f32
      %23 = vector.broadcast %cst_17 : f32 to vector<16x32xf32>
      %c0_18 = arith.constant 0 : index
      %c0_19 = arith.constant 0 : index
      %24 = vector.load %arg7[%c0_18, %c0_19] : memref<16x32xf32, #tpu.memory_space<vmem>>, vector<16x32xf32>
      tpu.vector_store %arg7[%c0_18, %c0_19], %23 {strides = array<i32>} : memref<16x32xf32, #tpu.memory_space<vmem>>, vector<16x32xf32>,
    } else {
    }
    %c0 = arith.constant 0 : index
    %c0_1 = arith.constant 0 : index
    %3 = vector.load %arg2[%c0, %c0_1] : memref<16x32xf32, #tpu.memory_space<vmem>>, vector<16x32xf32>
    %c0_2 = arith.constant 0 : index
    %c0_3 = arith.constant 0 : index
    %4 = vector.load %arg3[%c0_2, %c0_3] : memref<32x96xf32, #tpu.memory_space<vmem>>, vector<32x96xf32>
    %cst = arith.constant dense<0.000000e+00> : vector<16x96xf32>
    %5 = tpu.matmul %3, %4, %cst {dimension_numbers = #tpu.dot_dimension_numbers<[1], [0], [0], [1], [0, 0, 1, 1], [], []>} : vector<16x32xf32>, vector<32x96xf32>, vector<16x96xf32> -> vector<16x96xf32>
    %c0_4 = arith.constant 0 : index
    %c0_5 = arith.constant 0 : index
    %6 = vector.load %arg4[%c0_4, %c0_5] : memref<32x96xf32, #tpu.memory_space<vmem>>, vector<32x96xf32>
    %cst_6 = arith.constant dense<0.000000e+00> : vector<16x96xf32>
    %7 = tpu.matmul %3, %6, %cst_6 {dimension_numbers = #tpu.dot_dimension_numbers<[1], [0], [0], [1], [0, 0, 1, 1], [], []>} : vector<16x32xf32>, vector<32x96xf32>, vector<16x96xf32> -> vector<16x96xf32>
    %8 = arith.negf %5 : vector<16x96xf32>
    %9 = math.exp %8 : vector<16x96xf32>
    %cst_7 = arith.constant 1.000000e+00 : f32
    %10 = vector.broadcast %cst_7 : f32 to vector<16x96xf32>
    %11 = arith.addf %10, %9 : vector<16x96xf32>
    %12 = arith.divf %10, %11 : vector<16x96xf32>
    %13 = arith.mulf %5, %12 : vector<16x96xf32>
    %14 = arith.mulf %13, %7 : vector<16x96xf32>
    %c0_8 = arith.constant 0 : index
    %c0_9 = arith.constant 0 : index
    %15 = vector.load %arg7[%c0_8, %c0_9] : memref<16x32xf32, #tpu.memory_space<vmem>>, vector<16x32xf32>
    %c0_10 = arith.constant 0 : index
    %c0_11 = arith.constant 0 : index
    %16 = vector.load %arg5[%c0_10, %c0_11] : memref<96x32xf32, #tpu.memory_space<vmem>>, vector<96x32xf32>
    %cst_12 = arith.constant dense<0.000000e+00> : vector<16x32xf32>
    %17 = tpu.matmul %14, %16, %cst_12 {dimension_numbers = #tpu.dot_dimension_numbers<[1], [0], [0], [1], [0, 0, 1, 1], [], []>} : vector<16x96xf32>, vector<96x32xf32>, vector<16x32xf32> -> vector<16x32xf32>
    %18 = arith.addf %15, %17 : vector<16x32xf32>
    %c0_13 = arith.constant 0 : index
    %c0_14 = arith.constant 0 : index
    %19 = vector.load %arg7[%c0_13, %c0_14] : memref<16x32xf32, #tpu.memory_space<vmem>>, vector<16x32xf32>
    tpu.vector_store %arg7[%c0_13, %c0_14], %18 {strides = array<i32>} : memref<16x32xf32, #tpu.memory_space<vmem>>, vector<16x32xf32>,
    %c0_i32_15 = arith.constant 0 : i32
    %20 = arith.cmpi eq, %arg1, %c0_i32_15 : i32
    %21 = arith.extui %20 : i1 to i32
    %c0_i32_16 = arith.constant 0 : i32
    %22 = arith.cmpi ne, %21, %c0_i32_16 : i32
    scf.if %22 {
      %c0_17 = arith.constant 0 : index
      %c0_18 = arith.constant 0 : index
      %23 = vector.load %arg7[%c0_17, %c0_18] : memref<16x32xf32, #tpu.memory_space<vmem>>, vector<16x32xf32>
      %c0_19 = arith.constant 0 : index
      %c0_20 = arith.constant 0 : index
      %24 = vector.load %arg6[%c0_19, %c0_20] : memref<16x32xf32, #tpu.memory_space<vmem>>, vector<16x32xf32>
      tpu.vector_store %arg6[%c0_19, %c0_20], %23 {strides = array<i32>} : memref<16x32xf32, #tpu.memory_space<vmem>>, vector<16x32xf32>,
    } else {
    }
    return
  }
  func.func @transform_0(%arg0: i32, %arg1: i32) -> (i32, i32) {
    %c0_i32 = arith.constant 0 : i32
    %c0_i32_0 = arith.constant 0 : i32
    return %arg0, %c0_i32 : i32, i32
  }
  func.func @transform_1(%arg0: i32, %arg1: i32) -> (i32, i32) {
    %c0_i32 = arith.constant 0 : i32
    %c0_i32_0 = arith.constant 0 : i32
    return %c0_i32, %arg1 : i32, i32
  }
  func.func @transform_2(%arg0: i32, %arg1: i32) -> (i32, i32) {
    %c0_i32 = arith.constant 0 : i32
    %c0_i32_0 = arith.constant 0 : i32
    return %c0_i32, %arg1 : i32, i32
  }
  func.func @transform_3(%arg0: i32, %arg1: i32) -> (i32, i32) {
    %c0_i32 = arith.constant 0 : i32
    %c0_i32_0 = arith.constant 0 : i32
    return %arg1, %c0_i32 : i32, i32
  }
  func.func @transform_4(%arg0: i32, %arg1: i32) -> (i32, i32) {
    %c0_i32 = arith.constant 0 : i32
    %c0_i32_0 = arith.constant 0 : i32
    return %arg0, %c0_i32 : i32, i32
  }
}

</mosaic_0001>

<llo_original>
// kernel: tpu_custom_call.1
$region0: #{tpu_custom_call.1}
  #allocation0 [shape = 'u32[]', space=smem, size = 0x4, offset = 0x4, fixed_abs, tag = 'smem constant byte address 0x4 - core index']
  #allocation1 [shape = 'u32[144,128]{1,0:T(1,128)}', space=vmem, size = 0x12000, scoped, tag = 'internal scratch']
  #allocation2 [shape = 'f32[16,32]{1,0:T(8,128)}', space=vmem, size = 0x2000, scoped, tag = 'scratch operand']
  %s0 = inlined_call_operand.vmem [shape: f32[16,32], index: 0, kind: input, shape index: {}]
  %s1 = inlined_call_operand.vmem [shape: f32[32,96], index: 1, kind: input, shape index: {}]
  %s2 = inlined_call_operand.vmem [shape: f32[32,96], index: 2, kind: input, shape index: {}]
  %s3 = inlined_call_operand.vmem [shape: f32[96,32], index: 3, kind: input, shape index: {}]
  %s4 = inlined_call_operand.hbm [shape: f32[16,32], index: 4, kind: output, shape index: {}]
  %s5 = sld [smem:[#allocation0]]
  $region34: #{tpu_custom_call.1} parent=0
    _
  %s7 = ssub.s32 1, %s5
  %s8 = scalar_select 0, %s7, %s5
  $region1: #{tpu_custom_call.1} parent=0
    #allocation3 [shape = 'u8[8192]{0}', space=vmem, size = 0x2000, scoped, tag = 'output window, operand 0, single buffered']
    #allocation4 [shape = 's32[1]{0}', space=sflag, size = 0x4, scoped, tag = 'scoped memory for tpu_custom_call.1']
    %9 = vsyncpa [#allocation4], 0
    // Predicated region
    $region2: #{tpu_custom_call.1} parent=1 // pred_check
      _
    $region3: #{tpu_custom_call.1} parent=1 // pred_check_branch
      %11 = sbr.rel (0) target = $region5
    $region4: #{tpu_custom_call.1} parent=1 // pred_region
      _
    $region5: #{tpu_custom_call.1} parent=1 // pred_fallthru
      _
    // Predicated region
    $region6: #{tpu_custom_call.1} parent=1 // pred_check
      _
    $region7: #{tpu_custom_call.1} parent=1 // pred_check_branch
      %13 = sbr.rel (0) target = $region9
    $region8: #{tpu_custom_call.1} parent=1 // pred_region
      _
    $region9: #{tpu_custom_call.1} parent=1 // pred_fallthru
      _
    // Predicated region
    $region10: #{tpu_custom_call.1} parent=1 // pred_check
      _
    $region11: #{tpu_custom_call.1} parent=1 // pred_check_branch
      %15 = sbr.rel (0) target = $region13
    $region12: #{tpu_custom_call.1} parent=1 // pred_region
      _
    $region13: #{tpu_custom_call.1} parent=1 // pred_fallthru
      _
    // Predicated region
    $region14: #{tpu_custom_call.1} parent=1 // pred_check
      _
    $region15: #{tpu_custom_call.1} parent=1 // pred_check_branch
      %17 = sbr.rel (0) target = $region17
    $region16: #{tpu_custom_call.1} parent=1 // pred_region
      _
    $region17: #{tpu_custom_call.1} parent=1 // pred_fallthru
      _
    %p18 = scmp.eq.s32.totalorder 0, 0
    // Predicated region
    $region18: #{tpu_custom_call.1} parent=1 // pred_check
      %p19 = pneg %p18
    $region19: #{tpu_custom_call.1} parent=1 // pred_check_branch
      %21 = sbr.rel (%p19) target = $region21
    $region20: #{tpu_custom_call.1} parent=1 // pred_region
      %vm22 = vcmask 261120
      %23 = vst.msk [vmem:[#allocation2] sm:$0xff] %vm22, 0.0
      %24 = vst.msk [vmem:[#allocation2 + $0x8] sm:$0xff] %vm22, 0.0
    $region21: #{tpu_custom_call.1} parent=1 // pred_fallthru
      _
    %v25 = vld [vmem:[%s0] sm:$0xff]
    %v26 = vld [vmem:[%s0 + $0x8] sm:$0xff]
    %v27 = vld [vmem:[%s1] sm:$0xff]
    %v28 = vld [vmem:[%s1 + $0x8] sm:$0xff]
    %v29 = vld [vmem:[%s1 + $0x10] sm:$0xff]
    %v30 = vld [vmem:[%s1 + $0x18] sm:$0xff]
    %vm31 = vcmask 261120
    %v33 = vsel %vm31, %v25, 0
    %v36 = vsel %vm31, %v26, 0
    %38 = vmatprep.subr.mxu0 0.0
    %39 = vmatpush1.msra.mxu0 %v27
    %40 = vmatprep.subr.mxu0 0.0
    %41 = vmatpush1.msra.mxu0 %v28
    %42 = vmatprep.subr.mxu0 0.0
    %43 = vmatpush1.msra.mxu0 %v29
    %44 = vmatprep.subr.mxu0 0.0
    %45 = vmatpush1.msra.mxu0 %v30
    %46 = vmatprep.subr.mxu0 0.0
    %47 = vmatpush1.msra.mxu0 0.0
    %48 = vmatprep.subr.mxu0 0.0
    %49 = vmatpush1.msra.mxu0 0.0
    %50 = vmatprep.subr.mxu0 0.0
    %51 = vmatpush1.msra.mxu0 0.0
    %52 = vmatprep.subr.mxu0 0.0
    %53 = vmatpush1.msra.mxu0 0.0
    %54 = vmatprep.subr.mxu0 0.0
    %55 = vmatpush1.msra.mxu0 0.0
    %56 = vmatprep.subr.mxu0 0.0
    %57 = vmatpush1.msra.mxu0 0.0
    %58 = vmatprep.subr.mxu0 0.0
    %59 = vmatpush1.msra.mxu0 0.0
    %60 = vmatprep.subr.mxu0 0.0
    %61 = vmatpush1.msra.mxu0 0.0
    %62 = vmatprep.subr.mxu0 0.0
    %63 = vmatpush1.msra.mxu0 0.0
    %64 = vmatprep.subr.mxu0 0.0
    %65 = vmatpush1.msra.mxu0 0.0
    %66 = vmatprep.subr.mxu0 0.0
    %67 = vmatpush1.msra.mxu0 0.0
    %68 = vmatprep.subr.mxu0 0.0
    %69 = vmatpush1.msra.mxu0 0.0
    %70 = vmatprep.subr.mxu0 0.0
    %71 = vmatpush1.msra.mxu0 0.0
    %72 = vmatprep.subr.mxu0 0.0
    %73 = vmatpush1.msra.mxu0 0.0
    %74 = vmatprep.subr.mxu0 0.0
    %75 = vmatpush1.msra.mxu0 0.0
    %76 = vmatprep.subr.mxu0 0.0
    %77 = vmatpush1.msra.mxu0 0.0
    %78 = vmatprep.subr.mxu0 0.0
    %79 = vmatpush1.msra.mxu0 0.0
    %80 = vmatprep.subr.mxu0 0.0
    %81 = vmatpush1.msra.mxu0 0.0
    %82 = vmatprep.subr.mxu0 0.0
    %83 = vmatpush1.msra.mxu0 0.0
    %84 = vmatprep.subr.mxu0 0.0
    %85 = vmatpush1.msra.mxu0 0.0
    %86 = vmatprep.subr.mxu0 0.0
    %87 = vmatpush1.msra.mxu0 0.0
    %88 = vmatprep.subr.mxu0 0.0
    %89 = vmatpush1.msra.mxu0 0.0
    %90 = vmatprep.subr.mxu0 0.0
    %91 = vmatpush1.msra.mxu0 0.0
    %92 = vmatprep.subr.mxu0 0.0
    %93 = vmatpush1.msra.mxu0 0.0
    %94 = vmatprep.subr.mxu0 0.0
    %95 = vmatpush1.msra.mxu0 0.0
    %96 = vmatprep.subr.mxu0 0.0
    %97 = vmatpush1.msra.mxu0 0.0
    %98 = vmatprep.subr.mxu0 0.0
    %99 = vmatpush1.msra.mxu0 0.0
    %100 = vmatprep.subr.mxu0 0.0
    %101 = vmatpush1.msra.mxu0 0.0
    %102 = vmatprep.mubr.f32.mxu0 0.0
    %103 = vmatmul.mubr.f32.gmra.mrb[0].mxu0 %v33
    %v104 = vpop.f32.mrb[0].mxu0
    %v105 = vadd.f32 0.0, %v104
    %v106 = vpop.f32.mrb[0].mxu0
    %107 = vmatprep.mubr.f32.mxu0 0.0
    %108 = vmatmul.mubr.f32.gmra.mrb[0].mxu0 %v36
    %v109 = vpop.f32.mrb[0].mxu0
    %v110 = vadd.f32 0.0, %v109
    %v111 = vpop.f32.mrb[0].mxu0
    %112 = vdwg.mxu0
    %v113 = vld [vmem:[%s2] sm:$0xff]
    %v114 = vld [vmem:[%s2 + $0x8] sm:$0xff]
    %v115 = vld [vmem:[%s2 + $0x10] sm:$0xff]
    %v116 = vld [vmem:[%s2 + $0x18] sm:$0xff]
    %117 = vmatprep.subr.mxu0 0.0
    %118 = vmatpush1.msra.mxu0 %v113
    %119 = vmatprep.subr.mxu0 0.0
    %120 = vmatpush1.msra.mxu0 %v114
    %121 = vmatprep.subr.mxu0 0.0
    %122 = vmatpush1.msra.mxu0 %v115
    %123 = vmatprep.subr.mxu0 0.0
    %124 = vmatpush1.msra.mxu0 %v116
    %125 = vmatprep.subr.mxu0 0.0
    %126 = vmatpush1.msra.mxu0 0.0
    %127 = vmatprep.subr.mxu0 0.0
    %128 = vmatpush1.msra.mxu0 0.0
    %129 = vmatprep.subr.mxu0 0.0
    %130 = vmatpush1.msra.mxu0 0.0
    %131 = vmatprep.subr.mxu0 0.0
    %132 = vmatpush1.msra.mxu0 0.0
    %133 = vmatprep.subr.mxu0 0.0
    %134 = vmatpush1.msra.mxu0 0.0
    %135 = vmatprep.subr.mxu0 0.0
    %136 = vmatpush1.msra.mxu0 0.0
    %137 = vmatprep.subr.mxu0 0.0
    %138 = vmatpush1.msra.mxu0 0.0
    %139 = vmatprep.subr.mxu0 0.0
    %140 = vmatpush1.msra.mxu0 0.0
    %141 = vmatprep.subr.mxu0 0.0
    %142 = vmatpush1.msra.mxu0 0.0
    %143 = vmatprep.subr.mxu0 0.0
    %144 = vmatpush1.msra.mxu0 0.0
    %145 = vmatprep.subr.mxu0 0.0
    %146 = vmatpush1.msra.mxu0 0.0
    %147 = vmatprep.subr.mxu0 0.0
    %148 = vmatpush1.msra.mxu0 0.0
    %149 = vmatprep.subr.mxu0 0.0
    %150 = vmatpush1.msra.mxu0 0.0
    %151 = vmatprep.subr.mxu0 0.0
    %152 = vmatpush1.msra.mxu0 0.0
    %153 = vmatprep.subr.mxu0 0.0
    %154 = vmatpush1.msra.mxu0 0.0
    %155 = vmatprep.subr.mxu0 0.0
    %156 = vmatpush1.msra.mxu0 0.0
    %157 = vmatprep.subr.mxu0 0.0
    %158 = vmatpush1.msra.mxu0 0.0
    %159 = vmatprep.subr.mxu0 0.0
    %160 = vmatpush1.msra.mxu0 0.0
    %161 = vmatprep.subr.mxu0 0.0
    %162 = vmatpush1.msra.mxu0 0.0
    %163 = vmatprep.subr.mxu0 0.0
    %164 = vmatpush1.msra.mxu0 0.0
    %165 = vmatprep.subr.mxu0 0.0
    %166 = vmatpush1.msra.mxu0 0.0
    %167 = vmatprep.subr.mxu0 0.0
    %168 = vmatpush1.msra.mxu0 0.0
    %169 = vmatprep.subr.mxu0 0.0
    %170 = vmatpush1.msra.mxu0 0.0
    %171 = vmatprep.subr.mxu0 0.0
    %172 = vmatpush1.msra.mxu0 0.0
    %173 = vmatprep.subr.mxu0 0.0
    %174 = vmatpush1.msra.mxu0 0.0
    %175 = vmatprep.subr.mxu0 0.0
    %176 = vmatpush1.msra.mxu0 0.0
    %177 = vmatprep.subr.mxu0 0.0
    %178 = vmatpush1.msra.mxu0 0.0
    %179 = vmatprep.subr.mxu0 0.0
    %180 = vmatpush1.msra.mxu0 0.0
    %181 = vmatprep.mubr.f32.mxu0 0.0
    %182 = vmatmul.mubr.f32.gmra.mrb[0].mxu0 %v33
    %v183 = vpop.f32.mrb[0].mxu0
    %v184 = vadd.f32 0.0, %v183
    %v185 = vpop.f32.mrb[0].mxu0
    %186 = vmatprep.mubr.f32.mxu0 0.0
    %187 = vmatmul.mubr.f32.gmra.mrb[0].mxu0 %v36
    %v188 = vpop.f32.mrb[0].mxu0
    %v189 = vadd.f32 0.0, %v188
    %v190 = vpop.f32.mrb[0].mxu0
    %191 = vdwg.mxu0
    %v192 = vxor.u32 %v105, 2147483648
    %v193 = vxor.u32 %v110, 2147483648
    %v194 = vmul.f32 %v192, 1.442695
    %v195 = vpow.pop %v194
    %v196 = vmul.f32 %v193, 1.442695
    %v197 = vpow.pop %v196
    %v198 = vadd.f32 %v195, 1.0
    %v199 = vadd.f32 %v197, 1.0
    %v200 = vrcp.pop %v198
    %v201 = vmul.f32 1.0, %v200
    %v202 = vrcp.pop %v199
    %v203 = vmul.f32 1.0, %v202
    %v204 = vmul.f32 %v105, %v201
    %v205 = vmul.f32 %v110, %v203
    %v206 = vmul.f32 %v204, %v184
    %v207 = vmul.f32 %v205, %v189
    %v208 = vld [vmem:[#allocation2] sm:$0xff]
    %v209 = vld [vmem:[#allocation2 + $0x8] sm:$0xff]
    %v210 = vld [vmem:[%s3] sm:$0xff]
    %v211 = vld [vmem:[%s3 + $0x8] sm:$0xff]
    %v212 = vld [vmem:[%s3 + $0x10] sm:$0xff]
    %v213 = vld [vmem:[%s3 + $0x18] sm:$0xff]
    %v214 = vld [vmem:[%s3 + $0x20] sm:$0xff]
    %v215 = vld [vmem:[%s3 + $0x28] sm:$0xff]
    %v216 = vld [vmem:[%s3 + $0x30] sm:$0xff]
    %v217 = vld [vmem:[%s3 + $0x38] sm:$0xff]
    %v218 = vld [vmem:[%s3 + $0x40] sm:$0xff]
    %v219 = vld [vmem:[%s3 + $0x48] sm:$0xff]
    %v220 = vld [vmem:[%s3 + $0x50] sm:$0xff]
    %v221 = vld [vmem:[%s3 + $0x58] sm:$0xff]
    %vm222 = vcmask 785408
    %v224 = vsel %vm222, %v206, 0
    %v227 = vsel %vm222, %v207, 0
    %229 = vmatprep.subr.mxu0 0.0
    %230 = vmatpush1.msra.mxu0 %v210
    %231 = vmatprep.subr.mxu0 0.0
    %232 = vmatpush1.msra.mxu0 %v211
    %233 = vmatprep.subr.mxu0 0.0
    %234 = vmatpush1.msra.mxu0 %v212
    %235 = vmatprep.subr.mxu0 0.0
    %236 = vmatpush1.msra.mxu0 %v213
    %237 = vmatprep.subr.mxu0 0.0
    %238 = vmatpush1.msra.mxu0 %v214
    %239 = vmatprep.subr.mxu0 0.0
    %240 = vmatpush1.msra.mxu0 %v215
    %241 = vmatprep.subr.mxu0 0.0
    %242 = vmatpush1.msra.mxu0 %v216
    %243 = vmatprep.subr.mxu0 0.0
    %244 = vmatpush1.msra.mxu0 %v217
    %245 = vmatprep.subr.mxu0 0.0
    %246 = vmatpush1.msra.mxu0 %v218
    %247 = vmatprep.subr.mxu0 0.0
    %248 = vmatpush1.msra.mxu0 %v219
    %249 = vmatprep.subr.mxu0 0.0
    %250 = vmatpush1.msra.mxu0 %v220
    %251 = vmatprep.subr.mxu0 0.0
    %252 = vmatpush1.msra.mxu0 %v221
    %253 = vmatprep.subr.mxu0 0.0
    %254 = vmatpush1.msra.mxu0 0.0
    %255 = vmatprep.subr.mxu0 0.0
    %256 = vmatpush1.msra.mxu0 0.0
    %257 = vmatprep.subr.mxu0 0.0
    %258 = vmatpush1.msra.mxu0 0.0
    %259 = vmatprep.subr.mxu0 0.0
    %260 = vmatpush1.msra.mxu0 0.0
    %261 = vmatprep.subr.mxu0 0.0
    %262 = vmatpush1.msra.mxu0 0.0
    %263 = vmatprep.subr.mxu0 0.0
    %264 = vmatpush1.msra.mxu0 0.0
    %265 = vmatprep.subr.mxu0 0.0
    %266 = vmatpush1.msra.mxu0 0.0
    %267 = vmatprep.subr.mxu0 0.0
    %268 = vmatpush1.msra.mxu0 0.0
    %269 = vmatprep.subr.mxu0 0.0
    %270 = vmatpush1.msra.mxu0 0.0
    %271 = vmatprep.subr.mxu0 0.0
    %272 = vmatpush1.msra.mxu0 0.0
    %273 = vmatprep.subr.mxu0 0.0
    %274 = vmatpush1.msra.mxu0 0.0
    %275 = vmatprep.subr.mxu0 0.0
    %276 = vmatpush1.msra.mxu0 0.0
    %277 = vmatprep.subr.mxu0 0.0
    %278 = vmatpush1.msra.mxu0 0.0
    %279 = vmatprep.subr.mxu0 0.0
    %280 = vmatpush1.msra.mxu0 0.0
    %281 = vmatprep.subr.mxu0 0.0
    %282 = vmatpush1.msra.mxu0 0.0
    %283 = vmatprep.subr.mxu0 0.0
    %284 = vmatpush1.msra.mxu0 0.0
    %285 = vmatprep.subr.mxu0 0.0
    %286 = vmatpush1.msra.mxu0 0.0
    %287 = vmatprep.subr.mxu0 0.0
    %288 = vmatpush1.msra.mxu0 0.0
    %289 = vmatprep.subr.mxu0 0.0
    %290 = vmatpush1.msra.mxu0 0.0
    %291 = vmatprep.subr.mxu0 0.0
    %292 = vmatpush1.msra.mxu0 0.0
    %293 = vmatprep.mubr.f32.mxu0 0.0
    %294 = vmatmul.mubr.f32.gmra.mrb[0].mxu0 %v224
    %v295 = vpop.f32.mrb[0].mxu0
    %v296 = vadd.f32 0.0, %v295
    %v297 = vpop.f32.mrb[0].mxu0
    %298 = vmatprep.mubr.f32.mxu0 0.0
    %299 = vmatmul.mubr.f32.gmra.mrb[0].mxu0 %v227
    %v300 = vpop.f32.mrb[0].mxu0
    %v301 = vadd.f32 0.0, %v300
    %v302 = vpop.f32.mrb[0].mxu0
    %303 = vdwg.mxu0
    %v304 = vadd.f32 %v208, %v296
    %v305 = vadd.f32 %v209, %v301
    %306 = vst.msk [vmem:[#allocation2] sm:$0xff] %vm31, %v304
    %307 = vst.msk [vmem:[#allocation2 + $0x8] sm:$0xff] %vm31, %v305
    // Predicated region
    $region22: #{tpu_custom_call.1} parent=1 // pred_check
      %p308 = pneg %p18
    $region23: #{tpu_custom_call.1} parent=1 // pred_check_branch
      %310 = sbr.rel (%p308) target = $region25
    $region24: #{tpu_custom_call.1} parent=1 // pred_region
      %v311 = vld [vmem:[#allocation2] sm:$0xff]
      %v312 = vld [vmem:[#allocation2 + $0x8] sm:$0xff]
      %313 = vst.msk [vmem:[#allocation3] sm:$0xff] %vm31, %v311
      %314 = vst.msk [vmem:[#allocation3 + $0x8] sm:$0xff] %vm31, %v312
    $region25: #{tpu_custom_call.1} parent=1 // pred_fallthru
      _
    // Predicated region
    $region26: #{tpu_custom_call.1} parent=1 // pred_check
      _
    $region27: #{tpu_custom_call.1} parent=1 // pred_check_branch
      %316 = sbr.rel (0) target = $region29
    $region28: #{tpu_custom_call.1} parent=1 // pred_region
      %s318 = ssub.s32 256, 256
      %319 = vsyncadd [#allocation4], %s318
      %s320 = sshll.u32 [#allocation3], 4
      %s321 = int_to_ptr.vmem [resolvable:$true] %s320
      %326 = dma.vmem_to_hbm [thread:$0]  %s321, 256, %s4, [#allocation4], 128, 128, 8
    $region29: #{tpu_custom_call.1} parent=1 // pred_fallthru
      _
    // Predicated region
    $region30: #{tpu_custom_call.1} parent=1 // pred_check
      _
    $region31: #{tpu_custom_call.1} parent=1 // pred_check_branch
      %328 = sbr.rel (0) target = $region33
    $region32: #{tpu_custom_call.1} parent=1 // pred_region
      %329 = dma.done [#allocation4], 256
    $region33: #{tpu_custom_call.1} parent=1 // pred_fallthru
      _
    %330 = vsyncpa [#allocation4], 1

</llo_original>
